<compile_context>
chip_gen: v6e
topology: v6e:2x2x1
jax: 0.10.0
libtpu: 0.0.40
codegen_flags: <defaults>
</compile_context>

<pallas_src>
import functools

import jax
import jax.numpy as jnp
from jax.experimental import pallas as pl
from jax.experimental.pallas import tpu as pltpu

_MAX_TILE_ROWS = 2048   # batch rows per block (multiple of 16 for bf16/int8 tiling)


def _fploss1_kernel(x_ref, y_ref, out_ref, acc_ref, *, batch, tile_b,
                    tiles_per_core, use_stable_math):
    c = pl.program_id(0)       # TensorCore split ("parallel")
    i = pl.program_id(1)       # reduction step   ("arbitrary")

    @pl.when(i == 0)
    def _init():
        acc_ref[...] = jnp.zeros_like(acc_ref)

    # Scalar row threshold for this logical tile.  Interior tiles: thr >= tile_b
    # (mask all-true).  Ragged last tile: 0 < thr < tile_b.  Duplicated (clamped)
    # tile on the second core when num_tiles is odd: thr <= 0 (mask all-false).
    t = c * tiles_per_core + i
    thr = batch - t * tile_b

    x = x_ref[:, 0:1].astype(jnp.float32)     # (tile_b, 1) channel-0 logits
    y = y_ref[...].astype(jnp.float32)        # (tile_b, 1) labels

    row = jax.lax.broadcasted_iota(jnp.int32, (tile_b, 1), 0)
    mask = row < thr
    x = jnp.where(mask, x, 0.0)               # keep garbage out of exp/log
    y_pos = jnp.where(mask, y, 0.0)           # labels       (masked)
    y_neg = jnp.where(mask, 1.0 - y, 0.0)     # 1 - labels   (masked)

    if use_stable_math:
        # softplus identity: fewer EUP transcendentals and no log(0) for large
        # positive logits.
        e = jnp.exp(-x)
        log_outs = -jnp.log(1.0 + e)          # log(sigmoid(x))
        log_neg_outs = log_outs - x           # log(1 - sigmoid(x)) -- VPU only
        outs = 1.0 / (1.0 + e)
    else:
        # Bit-tracks the PyTorch module's op sequence.
        outs = jax.nn.sigmoid(x)
        log_outs = jnp.log(outs)
        log_neg_outs = jnp.log(1.0 - outs)
    neg_outs = 1.0 - outs

    # Fused operand of the two means:  h_pos_loss + 2 * h_neg_loss
    h = neg_outs * (y_pos * log_outs) + 2.0 * (outs * (y_neg * log_neg_outs))
    acc_ref[...] += h                         # pure VPU add in steady state

    @pl.when(i == tiles_per_core - 1)
    def _finalize():
        total = jnp.sum(acc_ref[...])         # one cross-sublane reduce per core
        out_ref[...] = jnp.zeros_like(out_ref) + total


def fploss1(output, labels, *, max_tile_rows=_MAX_TILE_ROWS, use_stable_math=True):
    """output: (B, C) logits (f32/bf16); labels: (B, 1) or (B,). Returns scalar f32."""
    B, C = output.shape
    if labels.ndim == 1:
        labels = labels.reshape(B, 1)          # metadata-only reshape
    assert labels.shape == (B, 1)

    # Block size over the batch: either the whole batch (block dim == full array dim
    # is always layout-legal) or a capped multiple of 16 with a ragged last block.
    itemsize = jnp.dtype(output.dtype).itemsize
    row_budget = (4 * 1024 * 1024) // max(1, 2 * C * itemsize)   # <=4MiB double-buffered
    cap = max(16, (min(int(max_tile_rows), int(row_budget)) // 16) * 16)
    tile_b = B if B <= cap else cap

    num_tiles = -(-B // tile_b)
    tpc = -(-num_tiles // 2)                   # tiles per core (2-way "parallel" split)
    last_tile = num_tiles - 1

    def data_map(c, i):
        # Clamp so the possible extra step on the second core re-reads a valid block;
        # its contribution is zeroed by the in-kernel row mask (thr <= 0).
        return (jnp.minimum(c * tpc + i, last_tile), 0)

    kernel = functools.partial(
        _fploss1_kernel, batch=B, tile_b=tile_b, tiles_per_core=tpc,
        use_stable_math=use_stable_math)

    partials = pl.pallas_call(
        kernel,
        out_shape=jax.ShapeDtypeStruct((2, 8, 128), jnp.float32),
        grid_spec=pltpu.PrefetchScalarGridSpec(
            num_scalar_prefetch=0,
            grid=(2, tpc),
            in_specs=[
                pl.BlockSpec((tile_b, C), data_map),
                pl.BlockSpec((tile_b, 1), data_map),
            ],
            out_specs=pl.BlockSpec((1, 8, 128), lambda c, i: (c, 0, 0)),
            scratch_shapes=[pltpu.VMEM((tile_b, 1), jnp.float32)],
        ),
        compiler_params=pltpu.CompilerParams(
            dimension_semantics=("parallel", "arbitrary"),
        ),
    )(output, labels)

    return -(partials[0, 0, 0] + partials[1, 0, 0]) / B


def _reference(output, labels):
    # Pure-JAX reference mirroring the PyTorch forward exactly.
    outs = jax.nn.sigmoid(output[:, :1].astype(jnp.float32))
    labels = labels.astype(jnp.float32)
    neg_labels = 1.0 - labels
    neg_outs = 1.0 - outs
    pos_loss = labels * jnp.log(outs)
    neg_loss = neg_labels * jnp.log(neg_outs)
    h_pos_loss = neg_outs * pos_loss
    h_neg_loss = outs * neg_loss
    return -jnp.mean(h_pos_loss) - 2.0 * jnp.mean(h_neg_loss)


def _check(loss, ref):
    jax.block_until_ready(loss)
    assert jnp.allclose(loss, ref, atol=1e-5, rtol=1e-5), (loss, ref)


if __name__ == "__main__":
    key = jax.random.PRNGKey(0)
    k1, k2, k3, k4, k5, k6 = jax.random.split(key, 6)

    # Case 1: small (B, C) logits / (B, 1) labels, stable-math (default) path.
    B, C = 8, 4
    output = jax.random.normal(k1, (B, C), dtype=jnp.float32)
    labels = jax.random.bernoulli(k2, p=0.5, shape=(B, 1)).astype(jnp.float32)
    _check(fploss1(output, labels), _reference(output, labels))

    # Case 2: same inputs through the bit-tracking (original sigmoid/log) path.
    _check(fploss1(output, labels, use_stable_math=False),
           _reference(output, labels))

    # Case 3: batch not a multiple of 8/128 -> ragged rows inside a single block.
    B2, C2 = 300, 3
    output2 = jax.random.normal(k3, (B2, C2), dtype=jnp.float32)
    labels2 = jax.random.bernoulli(k4, p=0.5, shape=(B2, 1)).astype(jnp.float32)
    _check(fploss1(output2, labels2), _reference(output2, labels2))

    # Case 4: force small tiles -> multi-tile reduction, odd tile count, and the
    # clamped duplicate block on the second "core" of the parallel axis.
    _check(fploss1(output2, labels2, max_tile_rows=128),
           _reference(output2, labels2))

    # Case 5: bf16 logits DMA'd natively and upcast in-kernel.
    B3, C3 = 257, 2
    output3 = jax.random.normal(k5, (B3, C3), dtype=jnp.float32).astype(jnp.bfloat16)
    labels3 = jax.random.bernoulli(k6, p=0.5, shape=(B3, 1)).astype(jnp.float32)
    _check(fploss1(output3, labels3), _reference(output3, labels3))

    print("KERNEL_OK")
</pallas_src>

<mosaic_0001>
module attributes {stable_mosaic.version = 11 : i64} {
  func.func @_fploss1_kernel(%arg0: i32, %arg1: i32, %arg2: memref<8x4xf32, #tpu.memory_space<vmem>>, %arg3: memref<8x1xf32, #tpu.memory_space<vmem>>, %arg4: memref<1x8x128xf32, #tpu.memory_space<vmem>>, %arg5: memref<8x1xf32, #tpu.memory_space<vmem>>) attributes {dimension_semantics = [#tpu.dimension_semantics<parallel>, #tpu.dimension_semantics<arbitrary>], iteration_bounds = array<i64: 2, 1>, scalar_prefetch = 0 : i64, scratch_operands = 1 : i64, tpu.core_type = #tpu.core_type<tc>, window_params = [{transform_indices = @transform_0, window_bounds = array<i64: 8, 4>}, {transform_indices = @transform_1, window_bounds = array<i64: 8, 1>}, {transform_indices = @transform_2, window_bounds = array<i64: 1, 8, 128>}]} {
    %c0_i32 = arith.constant 0 : i32
    %0 = arith.cmpi eq, %arg1, %c0_i32 : i32
    %1 = arith.extui %0 : i1 to i32
    %c0_i32_0 = arith.constant 0 : i32
    %2 = arith.cmpi ne, %1, %c0_i32_0 : i32
    scf.if %2 {
      %cst_21 = arith.constant 0.000000e+00 : f32
      %48 = vector.broadcast %cst_21 : f32 to vector<8x1xf32>
      %c0_22 = arith.constant 0 : index
      %c0_23 = arith.constant 0 : index
      %49 = vector.load %arg5[%c0_22, %c0_23] : memref<8x1xf32, #tpu.memory_space<vmem>>, vector<8x1xf32>
      tpu.vector_store %arg5[%c0_22, %c0_23], %48 {strides = array<i32>} : memref<8x1xf32, #tpu.memory_space<vmem>>, vector<8x1xf32>,
    } else {
    }
    %c1_i32 = arith.constant 1 : i32
    %3 = arith.muli %arg0, %c1_i32 : i32
    %4 = arith.addi %3, %arg1 : i32
    %c8_i32 = arith.constant 8 : i32
    %5 = arith.muli %4, %c8_i32 : i32
    %c8_i32_1 = arith.constant 8 : i32
    %6 = arith.subi %c8_i32_1, %5 : i32
    %c0 = arith.constant 0 : index
    %c0_2 = arith.constant 0 : index
    %7 = vector.load %arg2[%c0, %c0_2] : memref<8x4xf32, #tpu.memory_space<vmem>>, vector<8x1xf32>
    %c0_3 = arith.constant 0 : index
    %c0_4 = arith.constant 0 : index
    %8 = vector.load %arg3[%c0_3, %c0_4] : memref<8x1xf32, #tpu.memory_space<vmem>>, vector<8x1xf32>
    %9 = tpu.iota {dimensions = array<i32: 0>} : vector<8x1xi32>
    %10 = vector.broadcast %6 : i32 to vector<8x1xi32>
    %11 = arith.cmpi slt, %9, %10 : vector<8x1xi32>
    %cst = arith.constant 0.000000e+00 : f32
    %12 = vector.broadcast %cst : f32 to vector<8x1xf32>
    %13 = arith.select %11, %7, %12 : vector<8x1xi1>, vector<8x1xf32>
    %cst_5 = arith.constant 0.000000e+00 : f32
    %14 = vector.broadcast %cst_5 : f32 to vector<8x1xf32>
    %15 = arith.select %11, %8, %14 : vector<8x1xi1>, vector<8x1xf32>
    %cst_6 = arith.constant 1.000000e+00 : f32
    %16 = vector.broadcast %cst_6 : f32 to vector<8x1xf32>
    %17 = arith.subf %16, %8 : vector<8x1xf32>
    %cst_7 = arith.constant 0.000000e+00 : f32
    %18 = vector.broadcast %cst_7 : f32 to vector<8x1xf32>
    %19 = arith.select %11, %17, %18 : vector<8x1xi1>, vector<8x1xf32>
    %cst_8 = arith.constant 0.000000e+00 : f32
    %20 = vector.broadcast %cst_8 : f32 to vector<8x1xf32>
    %21 = arith.subf %20, %13 : vector<8x1xf32>
    %22 = math.exp %21 : vector<8x1xf32>
    %cst_9 = arith.constant 1.000000e+00 : f32
    %23 = vector.broadcast %cst_9 : f32 to vector<8x1xf32>
    %24 = arith.addf %23, %22 : vector<8x1xf32>
    %25 = math.log %24 : vector<8x1xf32>
    %cst_10 = arith.constant 0.000000e+00 : f32
    %26 = vector.broadcast %cst_10 : f32 to vector<8x1xf32>
    %27 = arith.subf %26, %25 : vector<8x1xf32>
    %28 = arith.subf %27, %13 : vector<8x1xf32>
    %cst_11 = arith.constant 1.000000e+00 : f32
    %29 = vector.broadcast %cst_11 : f32 to vector<8x1xf32>
    %30 = arith.addf %29, %22 : vector<8x1xf32>
    %cst_12 = arith.constant 1.000000e+00 : f32
    %31 = vector.broadcast %cst_12 : f32 to vector<8x1xf32>
    %32 = arith.divf %31, %30 : vector<8x1xf32>
    %cst_13 = arith.constant 1.000000e+00 : f32
    %33 = vector.broadcast %cst_13 : f32 to vector<8x1xf32>
    %34 = arith.subf %33, %32 : vector<8x1xf32>
    %35 = arith.mulf %15, %27 : vector<8x1xf32>
    %36 = arith.mulf %34, %35 : vector<8x1xf32>
    %37 = arith.mulf %19, %28 : vector<8x1xf32>
    %38 = arith.mulf %32, %37 : vector<8x1xf32>
    %cst_14 = arith.constant 2.000000e+00 : f32
    %39 = vector.broadcast %cst_14 : f32 to vector<8x1xf32>
    %40 = arith.mulf %39, %38 : vector<8x1xf32>
    %41 = arith.addf %36, %40 : vector<8x1xf32>
    %c0_15 = arith.constant 0 : index
    %c0_16 = arith.constant 0 : index
    %42 = vector.load %arg5[%c0_15, %c0_16] : memref<8x1xf32, #tpu.memory_space<vmem>>, vector<8x1xf32>
    %43 = arith.addf %42, %41 : vector<8x1xf32>
    %c0_17 = arith.constant 0 : index
    %c0_18 = arith.constant 0 : index
    %44 = vector.load %arg5[%c0_17, %c0_18] : memref<8x1xf32, #tpu.memory_space<vmem>>, vector<8x1xf32>
    tpu.vector_store %arg5[%c0_17, %c0_18], %43 {strides = array<i32>} : memref<8x1xf32, #tpu.memory_space<vmem>>, vector<8x1xf32>,
    %c0_i32_19 = arith.constant 0 : i32
    %45 = arith.cmpi eq, %arg1, %c0_i32_19 : i32
    %46 = arith.extui %45 : i1 to i32
    %c0_i32_20 = arith.constant 0 : i32
    %47 = arith.cmpi ne, %46, %c0_i32_20 : i32
    scf.if %47 {
      %c0_21 = arith.constant 0 : index
      %c0_22 = arith.constant 0 : index
      %48 = vector.load %arg5[%c0_21, %c0_22] : memref<8x1xf32, #tpu.memory_space<vmem>>, vector<8x1xf32>
      %49 = vector.shape_cast %48 : vector<8x1xf32> to vector<1x8x1xf32>
      %cst_23 = arith.constant dense<0.000000e+00> : vector<1xf32>
      %50 = vector.multi_reduction <add>, %49, %cst_23 [1, 2] : vector<1x8x1xf32> to vector<1xf32>
      %51 = vector.shape_cast %50 : vector<1xf32> to vector<1x1x1xf32>
      %52 = vector.extract %51[0, 0, 0] : f32 from vector<1x1x1xf32>
      %cst_24 = arith.constant 0.000000e+00 : f32
      %53 = vector.broadcast %cst_24 : f32 to vector<1x8x128xf32>
      %54 = vector.broadcast %52 : f32 to vector<1x8x128xf32>
      %55 = arith.addf %53, %54 : vector<1x8x128xf32>
      %c0_25 = arith.constant 0 : index
      %c0_26 = arith.constant 0 : index
      %c0_27 = arith.constant 0 : index
      %56 = vector.load %arg4[%c0_25, %c0_26, %c0_27] : memref<1x8x128xf32, #tpu.memory_space<vmem>>, vector<1x8x128xf32>
      tpu.vector_store %arg4[%c0_25, %c0_26, %c0_27], %55 {strides = array<i32>} : memref<1x8x128xf32, #tpu.memory_space<vmem>>, vector<1x8x128xf32>,
    } else {
    }
    return
  }
  func.func @transform_0(%arg0: i32, %arg1: i32) -> (i32, i32) {
    %c1_i32 = arith.constant 1 : i32
    %0 = arith.muli %arg0, %c1_i32 : i32
    %1 = arith.addi %0, %arg1 : i32
    %c0_i32 = arith.constant 0 : i32
    %2 = arith.minsi %1, %c0_i32 : i32
    %c0_i32_0 = arith.constant 0 : i32
    %c0_i32_1 = arith.constant 0 : i32
    return %2, %c0_i32_0 : i32, i32
  }
  func.func @transform_1(%arg0: i32, %arg1: i32) -> (i32, i32) {
    %c1_i32 = arith.constant 1 : i32
    %0 = arith.muli %arg0, %c1_i32 : i32
    %1 = arith.addi %0, %arg1 : i32
    %c0_i32 = arith.constant 0 : i32
    %2 = arith.minsi %1, %c0_i32 : i32
    %c0_i32_0 = arith.constant 0 : i32
    %c0_i32_1 = arith.constant 0 : i32
    return %2, %c0_i32_0 : i32, i32
  }
  func.func @transform_2(%arg0: i32, %arg1: i32) -> (i32, i32, i32) {
    %c0_i32 = arith.constant 0 : i32
    %c0_i32_0 = arith.constant 0 : i32
    %c0_i32_1 = arith.constant 0 : i32
    return %arg0, %c0_i32, %c0_i32_0 : i32, i32, i32
  }
}

</mosaic_0001>

<llo_original>
// kernel: tpu_custom_call.1
$region0: #{tpu_custom_call.1}
  #allocation0 [shape = 'u32[]', space=smem, size = 0x4, offset = 0x4, fixed_abs, tag = 'smem constant byte address 0x4 - core index']
  #allocation1 [shape = 'u32[144,128]{1,0:T(1,128)}', space=vmem, size = 0x12000, scoped, tag = 'internal scratch']
  #allocation2 [shape = 'f32[8,1]{1,0:T(8,128)}', space=vmem, size = 0x1000, scoped, tag = 'scratch operand']
  %s0 = inlined_call_operand.vmem [shape: f32[8,4], index: 0, kind: input, shape index: {}]
  %s1 = inlined_call_operand.vmem [shape: f32[8,1], index: 1, kind: input, shape index: {}]
  %s2 = inlined_call_operand.hbm [shape: f32[2,8,128], index: 2, kind: output, shape index: {}]
  %s3 = sld [smem:[#allocation0]]
  $region49: #{tpu_custom_call.1} parent=0
    _
  %s5 = ssub.s32 1, %s3
  %s6 = scalar_select 0, %s5, %s3
  $region1: #{tpu_custom_call.1} parent=0
    #allocation3 [shape = 'u8[8192]{0}', space=vmem, size = 0x2000, scoped, tag = 'output window, operand 0']
    #allocation4 [shape = 's32[2]{0}', space=sflag, size = 0x8, scoped, tag = 'scoped memory for tpu_custom_call.1']
    %7 = vsyncpa [#allocation4], 0
    %s8 = scalar_lea.sflag [#allocation4], 1
    %9 = vsyncpa %s8, 0
    loop: start=0, step=1, limit=4
    $region2: #{tpu_custom_call.1} parent=1 // loop_pre_header
      _
    $region3: #{tpu_custom_call.1} parent=1 // loop_header
      %s11 = sphi 0, %s15
      %p12 = scmp.ge.s32.totalorder %s11, 4
      %s18 = sphi 0, %s30
      %s19 = sphi 0, %s26
      %s20 = sphi 0, %s18
      %s21 = sphi 0, %s19
      %s22 = sphi 0, %s20
      %s23 = sphi 0, %s21
      %s39 = sphi 0, %s41
      %s42 = sphi 0, %s39
      %s43 = sphi 0, %s42
      %s59 = sphi 0, %s43
      %s71 = sphi 0, %s73
      %s74 = sphi 0, %s71
      %s75 = sphi 0, %s74
      %s91 = sphi 0, %s75
      %s97 = sphi 0, %s99
      %s100 = sphi 0, %s97
      %s101 = sphi 0, %s100
      %s117 = sphi 0, %s101
    $region4: #{tpu_custom_call.1} parent=1 // loop_header_branch
      %14 = sbr.rel (%p12) target = $region8
    $region5: #{tpu_custom_call.1} parent=1 // loop_body
      %s16 = ssub.s32 %s11, 1
      %s17 = ssub.s32 %s11, 2
      %s24 = sadd.s32 1, %s19
      %p25 = scmp.ge.s32.totalorder %s24, 1
      %s26 = scalar_select %p25, 0, %s24
      %s27 = sadd.s32 1, %s18
      %s28 = scalar_select %p25, %s27, %s18
      %p29 = scmp.ge.s32.totalorder %s28, 2
      %s30 = scalar_select %p29, 0, %s28
      %s31 = sadd.s32 %s18, %s19
      %p32 = scmp.lt.s32.totalorder %s31, 0
      %s33 = scalar_select %p32, %s31, 0
      %s34 = sadd.s32 %s30, %s26
      %p35 = scmp.lt.s32.totalorder %s34, 0
      %s36 = scalar_select %p35, %s34, 0
      %s37 = ssub.s32 %s33, %s36
      %p38 = scmp.eq.s32.totalorder %s37, 0
      %s40 = sadd.s32 %s39, 1
      %s41 = scalar_select %p38, %s39, %s40
      %p44 = pneg %p38
      %p45 = scmp.eq.s32.totalorder %s11, 1
      %p46 = por %p44, %p45
      %p47 = scmp.ne.s32.totalorder %s39, %s42
      %p48 = scmp.eq.s32.totalorder %s11, 0
      %p49 = por %p47, %p48
      %p50 = scmp.ne.s32.totalorder %s39, %s42
      %p51 = scmp.eq.s32.totalorder %s16, 1
      %p52 = por %p50, %p51
      %p53 = scmp.ne.s32.totalorder %s42, %s43
      %p54 = scmp.eq.s32.totalorder %s16, 0
      %p55 = por %p53, %p54
      %p56 = scmp.ne.s32.totalorder %s42, %s43
      %p57 = scmp.eq.s32.totalorder %s17, 1
      %p58 = por %p56, %p57
      %p60 = scmp.ne.s32.totalorder %s43, %s59
      %p61 = scmp.eq.s32.totalorder %s17, 0
      %p62 = por %p60, %p61
      %s63 = sadd.s32 %s18, %s19
      %p64 = scmp.lt.s32.totalorder %s63, 0
      %s65 = scalar_select %p64, %s63, 0
      %s66 = sadd.s32 %s30, %s26
      %p67 = scmp.lt.s32.totalorder %s66, 0
      %s68 = scalar_select %p67, %s66, 0
      %s69 = ssub.s32 %s65, %s68
      %p70 = scmp.eq.s32.totalorder %s69, 0
      %s72 = sadd.s32 %s71, 1
      %s73 = scalar_select %p70, %s71, %s72
      %p76 = pneg %p70
      %p77 = scmp.eq.s32.totalorder %s11, 1
      %p78 = por %p76, %p77
      %p79 = scmp.ne.s32.totalorder %s71, %s74
      %p80 = scmp.eq.s32.totalorder %s11, 0
      %p81 = por %p79, %p80
      %p82 = scmp.ne.s32.totalorder %s71, %s74
      %p83 = scmp.eq.s32.totalorder %s16, 1
      %p84 = por %p82, %p83
      %p85 = scmp.ne.s32.totalorder %s74, %s75
      %p86 = scmp.eq.s32.totalorder %s16, 0
      %p87 = por %p85, %p86
      %p88 = scmp.ne.s32.totalorder %s74, %s75
      %p89 = scmp.eq.s32.totalorder %s17, 1
      %p90 = por %p88, %p89
      %p92 = scmp.ne.s32.totalorder %s75, %s91
      %p93 = scmp.eq.s32.totalorder %s17, 0
      %p94 = por %p92, %p93
      %s95 = ssub.s32 %s18, %s30
      %p96 = scmp.eq.s32.totalorder %s95, 0
      %s98 = sadd.s32 %s97, 1
      %s99 = scalar_select %p96, %s97, %s98
      %p102 = pneg %p96
      %p103 = scmp.eq.s32.totalorder %s11, 1
      %p104 = por %p102, %p103
      %p105 = scmp.ne.s32.totalorder %s97, %s100
      %p106 = scmp.eq.s32.totalorder %s11, 0
      %p107 = por %p105, %p106
      %p108 = scmp.ne.s32.totalorder %s97, %s100
      %p109 = scmp.eq.s32.totalorder %s16, 1
      %p110 = por %p108, %p109
      %p111 = scmp.ne.s32.totalorder %s100, %s101
      %p112 = scmp.eq.s32.totalorder %s16, 0
      %p113 = por %p111, %p112
      %p114 = scmp.ne.s32.totalorder %s100, %s101
      %p115 = scmp.eq.s32.totalorder %s17, 1
      %p116 = por %p114, %p115
      %p118 = scmp.ne.s32.totalorder %s101, %s117
      %p119 = scmp.eq.s32.totalorder %s17, 0
      %p120 = por %p118, %p119
      %p121 = scmp.le.s32.totalorder 1, %s11
      %p122 = scmp.lt.s32.totalorder %s11, 3
      %p123 = pnand %p121, %p122
      %p124 = pneg %p123
      // Predicated region
      $region9: #{tpu_custom_call.1} parent=5 // pred_check
        _
      $region10: #{tpu_custom_call.1} parent=5 // pred_check_branch
        %126 = sbr.rel (%p123) target = $region12
      $region11: #{tpu_custom_call.1} parent=5 // pred_region
        %s127 = ssub.s32 %s11, 1
      $region12: #{tpu_custom_call.1} parent=5 // pred_fallthru
        _
      %p128 = scmp.lt.s32.totalorder %s11, 2
      // Predicated region
      $region13: #{tpu_custom_call.1} parent=5 // pred_check
        %p129 = pneg %p128
      $region14: #{tpu_custom_call.1} parent=5 // pred_check_branch
        %131 = sbr.rel (%p129) target = $region16
      $region15: #{tpu_custom_call.1} parent=5 // pred_region
        // Predicated region
        $region17: #{tpu_custom_call.1} parent=15 // pred_check
          %p132 = pneg %p49
        $region18: #{tpu_custom_call.1} parent=15 // pred_check_branch
          %134 = sbr.rel (%p132) target = $region20
        $region19: #{tpu_custom_call.1} parent=15 // pred_region
          %s135 = sadd.s32 %s18, %s19
          %p136 = scmp.lt.s32.totalorder %s135, 0
          %s137 = scalar_select %p136, %s135, 0
          %p138 = scmp.lt.s32.totalorder %s137, 0
          %s139 = scalar_select %p138, %s137, 0
          %s140 = smul.addr %s139, 8
          %s141 = scalar_lea.vmem %s0, %s140
          %s142 = sadd.s32 %s18, %s19
          %p143 = scmp.lt.s32.totalorder %s142, 0
          %s144 = scalar_select %p143, %s142, 0
        $region20: #{tpu_custom_call.1} parent=15 // pred_fallthru
          _
        // Predicated region
        $region21: #{tpu_custom_call.1} parent=15 // pred_check
          %p145 = pneg %p81
        $region22: #{tpu_custom_call.1} parent=15 // pred_check_branch
          %147 = sbr.rel (%p145) target = $region24
        $region23: #{tpu_custom_call.1} parent=15 // pred_region
          %s148 = sadd.s32 %s18, %s19
          %p149 = scmp.lt.s32.totalorder %s148, 0
          %s150 = scalar_select %p149, %s148, 0
          %p151 = scmp.lt.s32.totalorder %s150, 0
          %s152 = scalar_select %p151, %s150, 0
          %s153 = smul.addr %s152, 8
          %s154 = scalar_lea.vmem %s1, %s153
          %s155 = sadd.s32 %s18, %s19
          %p156 = scmp.lt.s32.totalorder %s155, 0
          %s157 = scalar_select %p156, %s155, 0
        $region24: #{tpu_custom_call.1} parent=15 // pred_fallthru
          _
      $region16: #{tpu_custom_call.1} parent=5 // pred_fallthru
        _
      %p158 = scmp.le.s32.totalorder 1, %s11
      %p159 = scmp.lt.s32.totalorder %s11, 3
      %p160 = pnand %p158, %p159
      %p161 = pneg %p160
      // Predicated region
      $region25: #{tpu_custom_call.1} parent=5 // pred_check
        _
      $region26: #{tpu_custom_call.1} parent=5 // pred_check_branch
        %163 = sbr.rel (%p160) target = $region28
      $region27: #{tpu_custom_call.1} parent=5 // pred_region
        %s164 = ssub.s32 %s11, 1
        %s165 = sadd.s32 %s20, %s21
        %p166 = scmp.lt.s32.totalorder %s165, 0
        %s167 = scalar_select %p166, %s165, 0
        %p168 = scmp.lt.s32.totalorder %s167, 0
        %s169 = scalar_select %p168, %s167, 0
        %s170 = smul.addr %s169, 8
        %s171 = scalar_lea.vmem %s0, %s170
        %p172 = pneg %p55
        %p173 = pneg %p52
        %s174 = sadd.s32 %s20, %s21
        %p175 = scmp.lt.s32.totalorder %s174, 0
        %s176 = scalar_select %p175, %s174, 0
        %p177 = scmp.lt.s32.totalorder %s176, 0
        %s178 = scalar_select %p177, %s176, 0
        %s179 = smul.addr %s178, 8
        %s180 = scalar_lea.vmem %s1, %s179
        %p181 = pneg %p87
        %p182 = pneg %p84
        %p183 = pneg %p113
        %p184 = pneg %p110
        %s185 = sand.u32 %s100, 1
        %s186 = scalar_lea.sflag [#allocation4], %s185
        %s187 = sand.u32 %s100, 1
        %s188 = smul.addr %s187, 8
        %s189 = scalar_lea.vmem [#allocation3], %s188
        %s190 = sadd.s32 %s20, %s21
        %p191 = scmp.lt.s32.totalorder %s190, 0
        %s192 = scalar_select %p191, %s190, 0
        %p193 = scmp.lt.s32.totalorder %s192, 0
        %s194 = scalar_select %p193, %s192, 0
        %s195 = smul.addr %s194, 8
        %s196 = scalar_lea.vmem %s0, %s195
        %s197 = sadd.s32 %s20, %s21
        %p198 = scmp.lt.s32.totalorder %s197, 0
        %s199 = scalar_select %p198, %s197, 0
        %s200 = sadd.s32 %s20, %s21
        %p201 = scmp.lt.s32.totalorder %s200, 0
        %s202 = scalar_select %p201, %s200, 0
        %p203 = scmp.lt.s32.totalorder %s202, 0
        %s204 = scalar_select %p203, %s202, 0
        %s205 = smul.addr %s204, 8
        %s206 = scalar_lea.vmem %s1, %s205
        %s207 = sadd.s32 %s20, %s21
        %p208 = scmp.lt.s32.totalorder %s207, 0
        %s209 = scalar_select %p208, %s207, 0
        %p210 = scmp.eq.s32.totalorder %s21, 0
        // Predicated region
        $region29: #{tpu_custom_call.1} parent=27 // pred_check
          %p211 = pneg %p210
        $region30: #{tpu_custom_call.1} parent=27 // pred_check_branch
          %213 = sbr.rel (%p211) target = $region32
        $region31: #{tpu_custom_call.1} parent=27 // pred_region
          %vm214 = vcmask 7168
          %215 = vst.msk [vmem:[#allocation2] sm:$0xff] %vm214, 0.0
        $region32: #{tpu_custom_call.1} parent=27 // pred_fallthru
          _
        %s216 = sadd.s32 %s20, %s21
        %s217 = smul.u32 %s216, 8
        %s218 = ssub.s32 8, %s217
        %v219 = vld [vmem:[%s196] sm:$0xff]
        %v220 = vld [vmem:[%s206] sm:$0xff]
        %v221 = vlaneseq
        %v222 = vshrl.u32 %v221, 7
        %v223 = vstv %s218
        %vm224 = vcmp.lt.s32.totalorder %v222, %v223
        %v225 = vsel %vm224, %v219, 0.0
        %v226 = vsel %vm224, %v220, 0.0
        %v227 = vsub.f32 1.0, %v220
        %v228 = vsel %vm224, %v227, 0.0
        %v229 = vsub.f32 0.0, %v225
        %v230 = vmul.f32 %v229, 1.442695
        %v231 = vpow.pop %v230
        %v232 = vadd.f32 %v231, 1.0
        %v233 = vlog2.pop %v232
        %v234 = vmul.f32 %v233, 0.6931472
        %v235 = vsub.f32 0.0, %v234
        %v236 = vsub.f32 %v235, %v225
        %v237 = vrcp.pop %v232
        %v238 = vmul.f32 1.0, %v237
        %v239 = vsub.f32 1.0, %v238
        %v240 = vmul.f32 %v226, %v235
        %v241 = vmul.f32 %v239, %v240
        %v242 = vmul.f32 %v228, %v236
        %v243 = vmul.f32 %v238, %v242
        %v244 = vmul.f32 %v243, 2.0
        %v245 = vadd.f32 %v241, %v244
        %v246 = vld [vmem:[#allocation2] sm:$0xff]
        %v247 = vadd.f32 %v246, %v245
        %vm248 = vcmask 7168
        %249 = vst.msk [vmem:[#allocation2] sm:$0xff] %vm248, %v247
        // Predicated region
        $region33: #{tpu_custom_call.1} parent=27 // pred_check
          %p250 = pneg %p210
        $region34: #{tpu_custom_call.1} parent=27 // pred_check_branch
          %252 = sbr.rel (%p250) target = $region36
        $region35: #{tpu_custom_call.1} parent=27 // pred_region
          %v253 = vld [vmem:[#allocation2] sm:$0xff]
          %v254 = vsel %vm248, %v253, 0.0
          %255 = vadd.xlane.f32.xlu0 %v254
          %v256 = vpop.xlane.xlu0 %255
          %v257 = vrot.slane %v256, 4
          %v258 = vadd.f32 %v256, %v257
          %v259 = vrot.slane %v258, 2
          %v260 = vadd.f32 %v258, %v259
          %v261 = vrot.slane %v260, 1
          %v262 = vadd.f32 %v260, %v261
          %s263 = vtos %v262
          %v264 = vstv %s263
          %v265 = vadd.f32 %v264, 0.0
          %266 = vst [vmem:[%s189] sm:$0xff] %v265
        $region36: #{tpu_custom_call.1} parent=27 // pred_fallthru
          _
        %s267 = sand.u32 %s100, 1
        %s268 = scalar_lea.sflag [#allocation4], %s267
        %s269 = sand.u32 %s100, 1
        %s270 = smul.addr %s269, 8
        %s271 = scalar_lea.vmem [#allocation3], %s270
        // Predicated region
        $region37: #{tpu_custom_call.1} parent=27 // pred_check
          %p272 = pneg %p110
        $region38: #{tpu_custom_call.1} parent=27 // pred_check_branch
          %274 = sbr.rel (%p272) target = $region40
        $region39: #{tpu_custom_call.1} parent=27 // pred_region
          %s276 = ssub.s32 128, 128
          %277 = vsyncadd %s268, %s276
          %s278 = smul.addr %s20, 128
          %s279 = scalar_lea.hbm %s2, %s278
          %s281 = sshll.u32 %s271, 4
          %s282 = int_to_ptr.vmem [resolvable:$true] %s281
          %284 = dma.vmem_to_hbm [thread:$0]  %s282, 128, %s279, %s268
        $region40: #{tpu_custom_call.1} parent=27 // pred_fallthru
          _
      $region28: #{tpu_custom_call.1} parent=5 // pred_fallthru
        _
      %p285 = scmp.le.s32.totalorder 2, %s11
      // Predicated region
      $region41: #{tpu_custom_call.1} parent=5 // pred_check
        %p286 = pneg %p285
      $region42: #{tpu_custom_call.1} parent=5 // pred_check_branch
        %288 = sbr.rel (%p286) target = $region44
      $region43: #{tpu_custom_call.1} parent=5 // pred_region
        %s289 = ssub.s32 %s11, 2
        // Predicated region
        $region45: #{tpu_custom_call.1} parent=43 // pred_check
          %p290 = pneg %p116
        $region46: #{tpu_custom_call.1} parent=43 // pred_check_branch
          %292 = sbr.rel (%p290) target = $region48
        $region47: #{tpu_custom_call.1} parent=43 // pred_region
          %s293 = sand.u32 %s101, 1
          %s294 = scalar_lea.sflag [#allocation4], %s293
          %s295 = sand.u32 %s101, 1
          %s296 = smul.addr %s295, 8
          %s297 = scalar_lea.vmem [#allocation3], %s296
          %298 = dma.done %s294, 128
        $region48: #{tpu_custom_call.1} parent=43 // pred_fallthru
          _
      $region44: #{tpu_custom_call.1} parent=5 // pred_fallthru
        _
    $region6: #{tpu_custom_call.1} parent=1 // loop_footer
      %s15 = sadd.s32 1, %s11
    $region7: #{tpu_custom_call.1} parent=1 // loop_footer_branch
      %10 = sbr.rel target = $region3
    $region8: #{tpu_custom_call.1} parent=1 // loop_exit
      _
    %299 = vsyncpa [#allocation4], 1
    %s300 = scalar_lea.sflag [#allocation4], 1
    %301 = vsyncpa %s300, 1

</llo_original>
